<compile_context>
chip_gen: v7x
topology: tpu7x:2x2x1
jax: 0.10.0
libtpu: 0.0.40
codegen_flags: <defaults>
</compile_context>

<pallas_src>
import jax
import jax.numpy as jnp
from jax.experimental import pallas as pl
from jax.experimental.pallas import tpu as pltpu

LANE = 128       # lane width: keep last dims dense multiples of 128
SUB_BF16 = 16    # bf16 sublane packing granularity for the batch tile


def _round_up(n: int, m: int) -> int:
    return ((n + m - 1) // m) * m


# --------------------------------------------------------------------------- kernel
def _decoder_kernel(x_ref, w1_ref, b1_ref, w2_ref, b2_ref, o_ref):
    # Layer 1: bf16 MXU feed (x cast in-kernel if it arrived f32), f32 accumulate,
    # bias + ReLU in f32 (v5e-friendly: no bf16 elementwise).
    x = x_ref[...].astype(w1_ref.dtype)
    h = jnp.dot(x, w1_ref[...], preferred_element_type=jnp.float32)
    h = jnp.maximum(h + b1_ref[...], 0.0)                  # (TB, ndf_p) + (1, ndf_p)
    # Layer 2: single cast back to bf16 for the MXU, f32 accumulate, sigmoid in f32.
    y = jnp.dot(h.astype(w2_ref.dtype), w2_ref[...],
                preferred_element_type=jnp.float32)
    o_ref[...] = jax.nn.sigmoid(y + b2_ref[...]).astype(o_ref.dtype)


# ---------------------------------------------------------------- one-time weight prep
def prepare_decoder_params(w1, b1, w2, b2, *, compute_dtype=jnp.bfloat16):
    """One-time prep: transpose weights to (in,out), cast to bf16, zero-pad lane-dense.

    Do this at model init (or with constant weights under jit) so each forward call
    does NOT pay an HBM transpose/pad pass over the weight matrices.
    Shapes: w1 (ndf, lf), b1 (ndf,), w2 (out_ftr, ndf), b2 (out_ftr,).
    """
    ndf, lf = w1.shape
    out_ftr, ndf2 = w2.shape
    assert ndf2 == ndf and b1.shape == (ndf,) and b2.shape == (out_ftr,)
    lf_p, ndf_p, out_p = (_round_up(d, LANE) for d in (lf, ndf, out_ftr))

    def pad2d(a, rows, cols, dtype):
        a = a.astype(dtype)
        if a.shape == (rows, cols):
            return a
        return jnp.zeros((rows, cols), dtype).at[:a.shape[0], :a.shape[1]].set(a)

    w1_t = pad2d(jnp.transpose(w1), lf_p, ndf_p, compute_dtype)     # (lf_p, ndf_p)
    w2_t = pad2d(jnp.transpose(w2), ndf_p, out_p, compute_dtype)    # (ndf_p, out_p)
    b1_2d = pad2d(b1[None, :], 1, ndf_p, jnp.float32)               # biases stay f32
    b2_2d = pad2d(b2[None, :], 1, out_p, jnp.float32)
    return (w1_t, b1_2d, w2_t, b2_2d)


# ------------------------------------------------------------------ tiling / VMEM plan
def _vmem_capacity_bytes() -> int:
    try:
        cap = int(getattr(pltpu.get_tpu_info(), "vmem_capacity_bytes", 0))
        if cap > 0:
            return cap
    except Exception:
        pass
    return 128 << 20   # v5e/v6e default; v7x (64 MiB) is handled by the query above


def _const_spec(shape):
    """BlockSpec for a grid-constant resident operand: single-buffered if supported."""
    index_map = lambda i: (0, 0)
    if hasattr(pl, "Buffered"):
        try:
            return pl.BlockSpec(shape, index_map, pipeline_mode=pl.Buffered(1))
        except TypeError:
            pass
    return pl.BlockSpec(shape, index_map)


def _select_tile_b(B, lf_p, ndf_p, out_p, x_bytes, w_bytes, out_bytes,
                   max_tile_b, single_buf_weights, vmem_cap):
    budget = min(vmem_cap // 2, 96 << 20)          # ~32 MiB budget on v7x, more on v5e/v6e
    wbuf = 1 if single_buf_weights else 2
    fixed = wbuf * ((lf_p * ndf_p + ndf_p * out_p) * w_bytes + (ndf_p + out_p) * 4)
    per_row = (2 * lf_p * x_bytes                  # x tile, double-buffered
               + 2 * out_p * out_bytes             # out tile, double-buffered
               + ndf_p * 4                         # f32 hidden h
               + out_p * 4)                        # f32 pre-sigmoid accumulator
    by_vmem = max((budget - fixed) // max(per_row, 1), SUB_BF16)
    # TODO(synk): for decoders whose bf16 W2 alone exceeds the VMEM budget, stream W2
    # over an inner out_p grid axis (h kept in VMEM scratch) instead of this cap.
    tile_b = int(min(max_tile_b, _round_up(B, SUB_BF16), by_vmem))
    if tile_b >= 256:
        tile_b = (tile_b // 256) * 256             # full 256-row MXU M-feed (v6e/v7x)
    else:
        tile_b = _round_up(tile_b, SUB_BF16)
    tile_b = max(tile_b, SUB_BF16)
    # Give >=2 "parallel" grid steps at large B so v7x's 2nd TensorCore has work.
    if B >= 512 and _round_up(B, tile_b) // tile_b == 1:
        tile_b = _round_up((_round_up(B, SUB_BF16) + 1) // 2, SUB_BF16)
    return tile_b


# ------------------------------------------------------------------------ forward pass
def variational_decoder_apply(x, prepared, *, out_ftr, out_dtype=None, max_tile_b=512):
    """sigmoid(relu(x @ W1^T + b1) @ W2^T + b2) with pre-prepared (padded) params."""
    w1_t, b1_2d, w2_t, b2_2d = prepared
    lf_p, ndf_p = w1_t.shape
    ndf_p2, out_p = w2_t.shape
    assert ndf_p2 == ndf_p and out_ftr <= out_p

    orig_shape = x.shape
    if x.ndim != 2:                                 # nn.Linear semantics: flatten leading dims
        x = x.reshape(-1, orig_shape[-1])
    B, lf = x.shape
    assert lf <= lf_p

    compute_dtype = w1_t.dtype
    out_dtype = x.dtype if out_dtype is None else out_dtype
    w_bytes = jnp.dtype(compute_dtype).itemsize
    out_bytes = jnp.dtype(out_dtype).itemsize
    single_buf = hasattr(pl, "Buffered")
    vmem_cap = _vmem_capacity_bytes()

    tile_b = _select_tile_b(B, lf_p, ndf_p, out_p,
                            x_bytes=jnp.dtype(x.dtype).itemsize, w_bytes=w_bytes,
                            out_bytes=out_bytes, max_tile_b=max_tile_b,
                            single_buf_weights=single_buf, vmem_cap=vmem_cap)
    B_p = _round_up(B, tile_b)

    # Skip the pad/cast HBM round-trip when x is already aligned; the kernel casts
    # to bf16 in VMEM instead (hidden under the resident-weight DMA).
    need_pad_x = (lf != lf_p) or (B != B_p)
    if need_pad_x:
        x_in = jnp.zeros((B_p, lf_p), compute_dtype).at[:B, :lf].set(
            x.astype(compute_dtype))
        x_bytes = w_bytes
    else:
        x_in = x
        x_bytes = jnp.dtype(x.dtype).itemsize

    # Explicit scoped-VMEM limit from the actual footprint (+ headroom), clamped
    # below physical VMEM for the detected generation.
    wbuf = 1 if single_buf else 2
    footprint = (wbuf * ((lf_p * ndf_p + ndf_p * out_p) * w_bytes + (ndf_p + out_p) * 4)
                 + 2 * tile_b * lf_p * x_bytes
                 + 2 * tile_b * out_p * out_bytes
                 + tile_b * (ndf_p + out_p) * 4)
    vmem_limit = int(min(max(int(footprint * 1.5) + (4 << 20), 16 << 20),
                         vmem_cap - (8 << 20)))

    grid = (B_p // tile_b,)
    out_padded = pl.pallas_call(
        _decoder_kernel,
        out_shape=jax.ShapeDtypeStruct((B_p, out_p), out_dtype),
        grid_spec=pltpu.PrefetchScalarGridSpec(
            num_scalar_prefetch=0,
            grid=grid,
            in_specs=[
                pl.BlockSpec((tile_b, x_in.shape[1]), lambda i: (i, 0)),  # x tile
                _const_spec((lf_p, ndf_p)),                               # W1^T resident
                _const_spec((1, ndf_p)),                                  # b1 (f32)
                _const_spec((ndf_p, out_p)),                              # W2^T resident
                _const_spec((1, out_p)),                                  # b2 (f32)
            ],
            out_specs=pl.BlockSpec((tile_b, out_p), lambda i: (i, 0)),
        ),
        compiler_params=pltpu.CompilerParams(
            dimension_semantics=("parallel",),       # batch axis -> megacore on v7x
            vmem_limit_bytes=vmem_limit),
    )(x_in, w1_t, b1_2d, w2_t, b2_2d)

    out = out_padded
    if B_p != B or out_p != out_ftr:                 # skip slice when nothing was padded
        out = out[:B, :out_ftr]
    if len(orig_shape) != 2:
        out = out.reshape(*orig_shape[:-1], out_ftr)
    return out


def variational_decoder(x, w1, b1, w2, b2, *, out_dtype=None, max_tile_b=512,
                        compute_dtype=jnp.bfloat16):
    """Convenience wrapper (preps weights every call); prefer prepare_ + _apply."""
    prepared = prepare_decoder_params(w1, b1, w2, b2, compute_dtype=compute_dtype)
    return variational_decoder_apply(x, prepared, out_ftr=w2.shape[0],
                                     out_dtype=out_dtype, max_tile_b=max_tile_b)


def _reference(x, w1, b1, w2, b2):
    h = jnp.maximum(x @ w1.T + b1, 0.0)
    return jax.nn.sigmoid(h @ w2.T + b2)


if __name__ == "__main__":
    # Small shapes consistent with the module: lf (latent), ndf (hidden), out_ftr.
    B, lf, ndf, out_ftr = 16, 32, 64, 128

    key = jax.random.PRNGKey(0)
    kx, k1, k2, k3, k4 = jax.random.split(key, 5)

    x = jax.random.normal(kx, (B, lf), dtype=jnp.float32)
    w1 = jax.random.normal(k1, (ndf, lf), dtype=jnp.float32) * 0.1   # nn.Linear(lf, ndf)
    b1 = jax.random.normal(k2, (ndf,), dtype=jnp.float32) * 0.1
    w2 = jax.random.normal(k3, (out_ftr, ndf), dtype=jnp.float32) * 0.1  # nn.Linear(ndf, out_ftr)
    b2 = jax.random.normal(k4, (out_ftr,), dtype=jnp.float32) * 0.1

    # One-time weight prep (hoisted out of the per-call path).
    prepared = jax.block_until_ready(prepare_decoder_params(w1, b1, w2, b2))

    out = variational_decoder_apply(x, prepared, out_ftr=out_ftr)
    out = jax.block_until_ready(out)

    ref = _reference(x, w1, b1, w2, b2)
    assert out.shape == (B, out_ftr)
    # bf16 MXU inputs with f32 accumulation -> loose-ish tolerance vs the f32 reference.
    assert jnp.allclose(out, ref, atol=2e-2, rtol=2e-2), "mismatch vs reference"

    print("KERNEL_OK")
</pallas_src>

<mosaic_0001>
module attributes {stable_mosaic.version = 11 : i64} {
  func.func @_decoder_kernel(%arg0: i32, %arg1: memref<16x128xbf16, #tpu.memory_space<vmem>>, %arg2: memref<128x128xbf16, #tpu.memory_space<vmem>>, %arg3: memref<1x128xf32, #tpu.memory_space<vmem>>, %arg4: memref<128x128xbf16, #tpu.memory_space<vmem>>, %arg5: memref<1x128xf32, #tpu.memory_space<vmem>>, %arg6: memref<16x128xf32, #tpu.memory_space<vmem>>) attributes {dimension_semantics = [#tpu.dimension_semantics<parallel>], iteration_bounds = array<i64: 1>, scalar_prefetch = 0 : i64, scratch_operands = 0 : i64, tpu.core_type = #tpu.core_type<tc>, window_params = [{transform_indices = @transform_0, window_bounds = array<i64: 16, 128>}, {pipeline_mode = #tpu.pipeline_mode<synchronous>, transform_indices = @transform_1, window_bounds = array<i64: 128, 128>}, {pipeline_mode = #tpu.pipeline_mode<synchronous>, transform_indices = @transform_2, window_bounds = array<i64: 1, 128>}, {pipeline_mode = #tpu.pipeline_mode<synchronous>, transform_indices = @transform_3, window_bounds = array<i64: 128, 128>}, {pipeline_mode = #tpu.pipeline_mode<synchronous>, transform_indices = @transform_4, window_bounds = array<i64: 1, 128>}, {transform_indices = @transform_5, window_bounds = array<i64: 16, 128>}]} {
    %c0 = arith.constant 0 : index
    %c0_0 = arith.constant 0 : index
    %0 = vector.load %arg1[%c0, %c0_0] : memref<16x128xbf16, #tpu.memory_space<vmem>>, vector<16x128xbf16>
    %c0_1 = arith.constant 0 : index
    %c0_2 = arith.constant 0 : index
    %1 = vector.load %arg2[%c0_1, %c0_2] : memref<128x128xbf16, #tpu.memory_space<vmem>>, vector<128x128xbf16>
    %cst = arith.constant dense<0.000000e+00> : vector<16x128xf32>
    %2 = tpu.matmul %0, %1, %cst {dimension_numbers = #tpu.dot_dimension_numbers<[1], [0], [0], [1], [0, 0, 1, 1], [], []>} : vector<16x128xbf16>, vector<128x128xbf16>, vector<16x128xf32> -> vector<16x128xf32>
    %c0_3 = arith.constant 0 : index
    %c0_4 = arith.constant 0 : index
    %3 = vector.load %arg3[%c0_3, %c0_4] : memref<1x128xf32, #tpu.memory_space<vmem>>, vector<1x128xf32>
    %4 = vector.broadcast %3 : vector<1x128xf32> to vector<16x128xf32>
    %5 = arith.addf %2, %4 : vector<16x128xf32>
    %cst_5 = arith.constant 0.000000e+00 : f32
    %6 = vector.broadcast %cst_5 : f32 to vector<16x128xf32>
    %7 = arith.maximumf %5, %6 : vector<16x128xf32>
    %8 = arith.truncf %7 : vector<16x128xf32> to vector<16x128xbf16>
    %c0_6 = arith.constant 0 : index
    %c0_7 = arith.constant 0 : index
    %9 = vector.load %arg4[%c0_6, %c0_7] : memref<128x128xbf16, #tpu.memory_space<vmem>>, vector<128x128xbf16>
    %cst_8 = arith.constant dense<0.000000e+00> : vector<16x128xf32>
    %10 = tpu.matmul %8, %9, %cst_8 {dimension_numbers = #tpu.dot_dimension_numbers<[1], [0], [0], [1], [0, 0, 1, 1], [], []>} : vector<16x128xbf16>, vector<128x128xbf16>, vector<16x128xf32> -> vector<16x128xf32>
    %c0_9 = arith.constant 0 : index
    %c0_10 = arith.constant 0 : index
    %11 = vector.load %arg5[%c0_9, %c0_10] : memref<1x128xf32, #tpu.memory_space<vmem>>, vector<1x128xf32>
    %12 = vector.broadcast %11 : vector<1x128xf32> to vector<16x128xf32>
    %13 = arith.addf %10, %12 : vector<16x128xf32>
    %14 = arith.negf %13 : vector<16x128xf32>
    %15 = math.exp %14 : vector<16x128xf32>
    %cst_11 = arith.constant 1.000000e+00 : f32
    %16 = vector.broadcast %cst_11 : f32 to vector<16x128xf32>
    %17 = arith.addf %16, %15 : vector<16x128xf32>
    %18 = arith.divf %16, %17 : vector<16x128xf32>
    %c0_12 = arith.constant 0 : index
    %c0_13 = arith.constant 0 : index
    %19 = vector.load %arg6[%c0_12, %c0_13] : memref<16x128xf32, #tpu.memory_space<vmem>>, vector<16x128xf32>
    tpu.vector_store %arg6[%c0_12, %c0_13], %18 {strides = array<i32>} : memref<16x128xf32, #tpu.memory_space<vmem>>, vector<16x128xf32>,
    return
  }
  func.func @transform_0(%arg0: i32) -> (i32, i32) {
    %c0_i32 = arith.constant 0 : i32
    %c0_i32_0 = arith.constant 0 : i32
    return %arg0, %c0_i32 : i32, i32
  }
  func.func @transform_1(%arg0: i32) -> (i32, i32) {
    %c0_i32 = arith.constant 0 : i32
    %c0_i32_0 = arith.constant 0 : i32
    %c0_i32_1 = arith.constant 0 : i32
    return %c0_i32, %c0_i32_0 : i32, i32
  }
  func.func @transform_2(%arg0: i32) -> (i32, i32) {
    %c0_i32 = arith.constant 0 : i32
    %c0_i32_0 = arith.constant 0 : i32
    %c0_i32_1 = arith.constant 0 : i32
    return %c0_i32, %c0_i32_0 : i32, i32
  }
  func.func @transform_3(%arg0: i32) -> (i32, i32) {
    %c0_i32 = arith.constant 0 : i32
    %c0_i32_0 = arith.constant 0 : i32
    %c0_i32_1 = arith.constant 0 : i32
    return %c0_i32, %c0_i32_0 : i32, i32
  }
  func.func @transform_4(%arg0: i32) -> (i32, i32) {
    %c0_i32 = arith.constant 0 : i32
    %c0_i32_0 = arith.constant 0 : i32
    %c0_i32_1 = arith.constant 0 : i32
    return %c0_i32, %c0_i32_0 : i32, i32
  }
  func.func @transform_5(%arg0: i32) -> (i32, i32) {
    %c0_i32 = arith.constant 0 : i32
    %c0_i32_0 = arith.constant 0 : i32
    return %arg0, %c0_i32 : i32, i32
  }
}

</mosaic_0001>

<llo_original>
// kernel: tpu_custom_call.1
$region0: #{tpu_custom_call.1}
  #allocation0 [shape = 'u32[]', space=smem, size = 0x4, offset = 0x4, fixed_abs, tag = 'smem constant byte address 0x4 - core index']
  #allocation1 [shape = 'u32[144,128]{1,0:T(1,128)}', space=vmem, size = 0x12000, scoped, tag = 'internal scratch']
  %s0 = inlined_call_operand.hbm [shape: bf16[16,128], index: 0, kind: input, shape index: {}]
  %s1 = inlined_call_operand.hbm [shape: bf16[128,128], index: 1, kind: input, shape index: {}]
  %s2 = inlined_call_operand.vmem [shape: f32[1,128], index: 2, kind: input, shape index: {}]
  %s3 = inlined_call_operand.hbm [shape: bf16[128,128], index: 3, kind: input, shape index: {}]
  %s4 = inlined_call_operand.vmem [shape: f32[1,128], index: 4, kind: input, shape index: {}]
  %s5 = inlined_call_operand.hbm [shape: f32[16,128], index: 5, kind: output, shape index: {}]
  %s6 = sld [smem:[#allocation0]]
  $region42: #{tpu_custom_call.1} parent=0
    _
  %s8 = ssub.s32 1, %s6
  %s9 = scalar_select 0, %s8, %s6
  $region1: #{tpu_custom_call.1} parent=0
    #allocation2 [shape = 'u8[4096]{0}', space=vmem, size = 0x1000, scoped, tag = 'input window, operand 0, single buffered']
    #allocation3 [shape = 's32[1]{0}', space=sflag, size = 0x4, scoped, tag = 'scoped memory for tpu_custom_call.1']
    #allocation4 [shape = 's32[1]{0}', space=sflag, size = 0x4, scoped, tag = 'scoped memory for tpu_custom_call.1']
    #allocation5 [shape = 'u8[32768]{0}', space=vmem, size = 0x8000, scoped, tag = 'input window, operand 1, single buffered']
    #allocation6 [shape = 's32[1]{0}', space=sflag, size = 0x4, scoped, tag = 'scoped memory for tpu_custom_call.1']
    #allocation7 [shape = 'u8[32768]{0}', space=vmem, size = 0x8000, scoped, tag = 'input window, operand 3, single buffered']
    #allocation8 [shape = 'u8[8192]{0}', space=vmem, size = 0x2000, scoped, tag = 'output window, operand 0, single buffered']
    %10 = vsyncpa [#allocation3], 0
    %11 = vsyncpa [#allocation6], 0
    %12 = vsyncpa [#allocation4], 0
    // Predicated region
    $region2: #{tpu_custom_call.1} parent=1 // pred_check
      _
    $region3: #{tpu_custom_call.1} parent=1 // pred_check_branch
      %14 = sbr.rel (0) target = $region5
    $region4: #{tpu_custom_call.1} parent=1 // pred_region
      %s16 = ssub.s32 128, 128
      %17 = vsyncadd [#allocation3], %s16
      %s18 = sshll.u32 [#allocation2], 4
      %s19 = int_to_ptr.vmem [resolvable:$true] %s18
      %24 = dma.hbm_to_vmem [thread:$0]  %s0, 128, %s19, [#allocation3], 64, 64, 4
    $region5: #{tpu_custom_call.1} parent=1 // pred_fallthru
      _
    // Predicated region
    $region6: #{tpu_custom_call.1} parent=1 // pred_check
      _
    $region7: #{tpu_custom_call.1} parent=1 // pred_check_branch
      %26 = sbr.rel (0) target = $region9
    $region8: #{tpu_custom_call.1} parent=1 // pred_region
      %s28 = ssub.s32 1024, 1024
      %29 = vsyncadd [#allocation6], %s28
      %s30 = sshll.u32 [#allocation5], 4
      %s31 = int_to_ptr.vmem [resolvable:$true] %s30
      %36 = dma.hbm_to_vmem [thread:$0]  %s1, 1024, %s31, [#allocation6], 64, 64, 4
    $region9: #{tpu_custom_call.1} parent=1 // pred_fallthru
      _
    // Predicated region
    $region10: #{tpu_custom_call.1} parent=1 // pred_check
      _
    $region11: #{tpu_custom_call.1} parent=1 // pred_check_branch
      %38 = sbr.rel (0) target = $region13
    $region12: #{tpu_custom_call.1} parent=1 // pred_region
      _
    $region13: #{tpu_custom_call.1} parent=1 // pred_fallthru
      _
    // Predicated region
    $region14: #{tpu_custom_call.1} parent=1 // pred_check
      _
    $region15: #{tpu_custom_call.1} parent=1 // pred_check_branch
      %40 = sbr.rel (0) target = $region17
    $region16: #{tpu_custom_call.1} parent=1 // pred_region
      %s42 = ssub.s32 1024, 1024
      %43 = vsyncadd [#allocation6], %s42
      %s44 = sshll.u32 [#allocation7], 4
      %s45 = int_to_ptr.vmem [resolvable:$true] %s44
      %50 = dma.hbm_to_vmem [thread:$0]  %s3, 1024, %s45, [#allocation6], 64, 64, 4
    $region17: #{tpu_custom_call.1} parent=1 // pred_fallthru
      _
    // Predicated region
    $region18: #{tpu_custom_call.1} parent=1 // pred_check
      _
    $region19: #{tpu_custom_call.1} parent=1 // pred_check_branch
      %52 = sbr.rel (0) target = $region21
    $region20: #{tpu_custom_call.1} parent=1 // pred_region
      _
    $region21: #{tpu_custom_call.1} parent=1 // pred_fallthru
      _
    // Predicated region
    $region22: #{tpu_custom_call.1} parent=1 // pred_check
      _
    $region23: #{tpu_custom_call.1} parent=1 // pred_check_branch
      %54 = sbr.rel (0) target = $region25
    $region24: #{tpu_custom_call.1} parent=1 // pred_region
      %55 = dma.done [#allocation3], 128
    $region25: #{tpu_custom_call.1} parent=1 // pred_fallthru
      _
    // Predicated region
    $region26: #{tpu_custom_call.1} parent=1 // pred_check
      _
    $region27: #{tpu_custom_call.1} parent=1 // pred_check_branch
      %57 = sbr.rel (0) target = $region29
    $region28: #{tpu_custom_call.1} parent=1 // pred_region
      %58 = dma.done [#allocation6], 1024
    $region29: #{tpu_custom_call.1} parent=1 // pred_fallthru
      _
    // Predicated region
    $region30: #{tpu_custom_call.1} parent=1 // pred_check
      _
    $region31: #{tpu_custom_call.1} parent=1 // pred_check_branch
      %60 = sbr.rel (0) target = $region33
    $region32: #{tpu_custom_call.1} parent=1 // pred_region
      %61 = dma.done [#allocation6], 1024
    $region33: #{tpu_custom_call.1} parent=1 // pred_fallthru
      _
    %v63 = vld [vmem:[#allocation2] sm:$0xf]
    %v64 = vld [vmem:[#allocation2 + $0x4] sm:$0xf]
    %v65 = vld [vmem:[#allocation5] sm:$0xf]
    %v66 = vld [vmem:[#allocation5 + $0x4] sm:$0xf]
    %v67 = vld [vmem:[#allocation5 + $0x8] sm:$0xf]
    %v68 = vld [vmem:[#allocation5 + $0xc] sm:$0xf]
    %v69 = vld [vmem:[#allocation5 + $0x10] sm:$0xf]
    %v70 = vld [vmem:[#allocation5 + $0x14] sm:$0xf]
    %v71 = vld [vmem:[#allocation5 + $0x18] sm:$0xf]
    %v72 = vld [vmem:[#allocation5 + $0x1c] sm:$0xf]
    %v73 = vld [vmem:[#allocation5 + $0x20] sm:$0xf]
    %v74 = vld [vmem:[#allocation5 + $0x24] sm:$0xf]
    %v75 = vld [vmem:[#allocation5 + $0x28] sm:$0xf]
    %v76 = vld [vmem:[#allocation5 + $0x2c] sm:$0xf]
    %v77 = vld [vmem:[#allocation5 + $0x30] sm:$0xf]
    %v78 = vld [vmem:[#allocation5 + $0x34] sm:$0xf]
    %v79 = vld [vmem:[#allocation5 + $0x38] sm:$0xf]
    %v80 = vld [vmem:[#allocation5 + $0x3c] sm:$0xf]
    %v81 = vld [vmem:[%s2] sm:$0x1]
    %v83 = vlaneseq
    %v84 = vshrl.u32 %v83, 7
    %v85 = vsub.s32 0, %v84
    %v86 = vrot.slane %v81, %v85
    %v90 = vunpack.c.l.b16 %v63
    %v91 = vunpack.c.l.b16 %v64
    %v92 = vpack.c.b16 %v91, %v90
    %v110 = vunpack.c.l.b16 %v65
    %v111 = vunpack.c.l.b16 %v66
    %v112 = vunpack.c.l.b16 %v67
    %v113 = vunpack.c.l.b16 %v68
    %v114 = vunpack.c.l.b16 %v69
    %v115 = vunpack.c.l.b16 %v70
    %v116 = vunpack.c.l.b16 %v71
    %v117 = vunpack.c.l.b16 %v72
    %v118 = vunpack.c.l.b16 %v73
    %v119 = vunpack.c.l.b16 %v74
    %v120 = vunpack.c.l.b16 %v75
    %v121 = vunpack.c.l.b16 %v76
    %v122 = vunpack.c.l.b16 %v77
    %v123 = vunpack.c.l.b16 %v78
    %v124 = vunpack.c.l.b16 %v79
    %v125 = vunpack.c.l.b16 %v80
    %v126 = vpack.c.b16 %v111, %v110
    %v127 = vpack.c.b16 %v113, %v112
    %v128 = vpack.c.b16 %v115, %v114
    %v129 = vpack.c.b16 %v117, %v116
    %v130 = vpack.c.b16 %v119, %v118
    %v131 = vpack.c.b16 %v121, %v120
    %v132 = vpack.c.b16 %v123, %v122
    %v133 = vpack.c.b16 %v125, %v124
    %142 = vmatprep.subr.bf16.mxu0 0
    %143 = vmatpush1.bf16.msra.mxu0 %v126
    %144 = vmatprep.subr.bf16.mxu0 0
    %145 = vmatpush1.bf16.msra.mxu0 %v127
    %146 = vmatprep.subr.bf16.mxu0 0
    %147 = vmatpush1.bf16.msra.mxu0 %v128
    %148 = vmatprep.subr.bf16.mxu0 0
    %149 = vmatpush1.bf16.msra.mxu0 %v129
    %150 = vmatprep.subr.bf16.mxu0 0
    %151 = vmatpush1.bf16.msra.mxu0 %v130
    %152 = vmatprep.subr.bf16.mxu0 0
    %153 = vmatpush1.bf16.msra.mxu0 %v131
    %154 = vmatprep.subr.bf16.mxu0 0
    %155 = vmatpush1.bf16.msra.mxu0 %v132
    %156 = vmatprep.subr.bf16.mxu0 0
    %157 = vmatpush1.bf16.msra.mxu0 %v133
    %158 = vmatprep.subr.bf16.mxu0 0
    %159 = vmatpush1.bf16.msra.mxu0 0
    %160 = vmatprep.subr.bf16.mxu0 0
    %161 = vmatpush1.bf16.msra.mxu0 0
    %162 = vmatprep.subr.bf16.mxu0 0
    %163 = vmatpush1.bf16.msra.mxu0 0
    %164 = vmatprep.subr.bf16.mxu0 0
    %165 = vmatpush1.bf16.msra.mxu0 0
    %166 = vmatprep.subr.bf16.mxu0 0
    %167 = vmatpush1.bf16.msra.mxu0 0
    %168 = vmatprep.subr.bf16.mxu0 0
    %169 = vmatpush1.bf16.msra.mxu0 0
    %170 = vmatprep.subr.bf16.mxu0 0
    %171 = vmatpush1.bf16.msra.mxu0 0
    %172 = vmatprep.subr.bf16.mxu0 0
    %173 = vmatpush1.bf16.msra.mxu0 0
    %174 = vmatprep.mubr.bf16.mxu0 0
    %175 = vmatmul.mubr.bf16.gmra.mrb[0].mxu0 %v92
    %v176 = vpop.f32.mrb[0].mxu0
    %v177 = vadd.f32 %v86, %v176
    %v178 = vpop.f32.mrb[0].mxu0
    %v179 = vpop.f32.mrb[0].mxu0
    %v180 = vadd.f32 %v86, %v179
    %v181 = vpop.f32.mrb[0].mxu0
    %182 = vdwg.mxu0
    %v183 = vmax.f32 %v177, 0.0
    %v184 = vmax.f32 %v180, 0.0
    %v185 = vpack.c.bf16 %v184, %v183
    %v186 = vld [vmem:[#allocation7] sm:$0xf]
    %v187 = vld [vmem:[#allocation7 + $0x4] sm:$0xf]
    %v188 = vld [vmem:[#allocation7 + $0x8] sm:$0xf]
    %v189 = vld [vmem:[#allocation7 + $0xc] sm:$0xf]
    %v190 = vld [vmem:[#allocation7 + $0x10] sm:$0xf]
    %v191 = vld [vmem:[#allocation7 + $0x14] sm:$0xf]
    %v192 = vld [vmem:[#allocation7 + $0x18] sm:$0xf]
    %v193 = vld [vmem:[#allocation7 + $0x1c] sm:$0xf]
    %v194 = vld [vmem:[#allocation7 + $0x20] sm:$0xf]
    %v195 = vld [vmem:[#allocation7 + $0x24] sm:$0xf]
    %v196 = vld [vmem:[#allocation7 + $0x28] sm:$0xf]
    %v197 = vld [vmem:[#allocation7 + $0x2c] sm:$0xf]
    %v198 = vld [vmem:[#allocation7 + $0x30] sm:$0xf]
    %v199 = vld [vmem:[#allocation7 + $0x34] sm:$0xf]
    %v200 = vld [vmem:[#allocation7 + $0x38] sm:$0xf]
    %v201 = vld [vmem:[#allocation7 + $0x3c] sm:$0xf]
    %v202 = vld [vmem:[%s4] sm:$0x1]
    %v204 = vlaneseq
    %v205 = vshrl.u32 %v204, 7
    %v206 = vsub.s32 0, %v205
    %v207 = vrot.slane %v202, %v206
    %v225 = vunpack.c.l.b16 %v186
    %v226 = vunpack.c.l.b16 %v187
    %v227 = vunpack.c.l.b16 %v188
    %v228 = vunpack.c.l.b16 %v189
    %v229 = vunpack.c.l.b16 %v190
    %v230 = vunpack.c.l.b16 %v191
    %v231 = vunpack.c.l.b16 %v192
    %v232 = vunpack.c.l.b16 %v193
    %v233 = vunpack.c.l.b16 %v194
    %v234 = vunpack.c.l.b16 %v195
    %v235 = vunpack.c.l.b16 %v196
    %v236 = vunpack.c.l.b16 %v197
    %v237 = vunpack.c.l.b16 %v198
    %v238 = vunpack.c.l.b16 %v199
    %v239 = vunpack.c.l.b16 %v200
    %v240 = vunpack.c.l.b16 %v201
    %v241 = vpack.c.b16 %v226, %v225
    %v242 = vpack.c.b16 %v228, %v227
    %v243 = vpack.c.b16 %v230, %v229
    %v244 = vpack.c.b16 %v232, %v231
    %v245 = vpack.c.b16 %v234, %v233
    %v246 = vpack.c.b16 %v236, %v235
    %v247 = vpack.c.b16 %v238, %v237
    %v248 = vpack.c.b16 %v240, %v239
    %257 = vmatprep.subr.bf16.mxu0 0
    %258 = vmatpush1.bf16.msra.mxu0 %v241
    %259 = vmatprep.subr.bf16.mxu0 0
    %260 = vmatpush1.bf16.msra.mxu0 %v242
    %261 = vmatprep.subr.bf16.mxu0 0
    %262 = vmatpush1.bf16.msra.mxu0 %v243
    %263 = vmatprep.subr.bf16.mxu0 0
    %264 = vmatpush1.bf16.msra.mxu0 %v244
    %265 = vmatprep.subr.bf16.mxu0 0
    %266 = vmatpush1.bf16.msra.mxu0 %v245
    %267 = vmatprep.subr.bf16.mxu0 0
    %268 = vmatpush1.bf16.msra.mxu0 %v246
    %269 = vmatprep.subr.bf16.mxu0 0
    %270 = vmatpush1.bf16.msra.mxu0 %v247
    %271 = vmatprep.subr.bf16.mxu0 0
    %272 = vmatpush1.bf16.msra.mxu0 %v248
    %273 = vmatprep.subr.bf16.mxu0 0
    %274 = vmatpush1.bf16.msra.mxu0 0
    %275 = vmatprep.subr.bf16.mxu0 0
    %276 = vmatpush1.bf16.msra.mxu0 0
    %277 = vmatprep.subr.bf16.mxu0 0
    %278 = vmatpush1.bf16.msra.mxu0 0
    %279 = vmatprep.subr.bf16.mxu0 0
    %280 = vmatpush1.bf16.msra.mxu0 0
    %281 = vmatprep.subr.bf16.mxu0 0
    %282 = vmatpush1.bf16.msra.mxu0 0
    %283 = vmatprep.subr.bf16.mxu0 0
    %284 = vmatpush1.bf16.msra.mxu0 0
    %285 = vmatprep.subr.bf16.mxu0 0
    %286 = vmatpush1.bf16.msra.mxu0 0
    %287 = vmatprep.subr.bf16.mxu0 0
    %288 = vmatpush1.bf16.msra.mxu0 0
    %289 = vmatprep.mubr.bf16.mxu0 0
    %290 = vmatmul.mubr.bf16.gmra.mrb[0].mxu0 %v185
    %v291 = vpop.f32.mrb[0].mxu0
    %v292 = vadd.f32 %v207, %v291
    %v293 = vpop.f32.mrb[0].mxu0
    %v294 = vpop.f32.mrb[0].mxu0
    %v295 = vadd.f32 %v207, %v294
    %v296 = vpop.f32.mrb[0].mxu0
    %297 = vdwg.mxu0
    %v298 = vxor.u32 %v292, 2147483648
    %v299 = vxor.u32 %v295, 2147483648
    %v300 = vmul.f32 %v298, 1.442695
    %v301 = vpow.pop %v300
    %v302 = vmul.f32 %v299, 1.442695
    %v303 = vpow.pop %v302
    %v304 = vadd.f32 %v301, 1.0
    %v305 = vadd.f32 %v303, 1.0
    %v306 = vrcp.pop %v304
    %v307 = vmul.f32 1.0, %v306
    %v308 = vrcp.pop %v305
    %v309 = vmul.f32 1.0, %v308
    %310 = vst [vmem:[#allocation8] sm:$0xff] %v307
    %311 = vst [vmem:[#allocation8 + $0x8] sm:$0xff] %v309
    // Predicated region
    $region34: #{tpu_custom_call.1} parent=1 // pred_check
      _
    $region35: #{tpu_custom_call.1} parent=1 // pred_check_branch
      %313 = sbr.rel (0) target = $region37
    $region36: #{tpu_custom_call.1} parent=1 // pred_region
      %s315 = ssub.s32 256, 256
      %316 = vsyncadd [#allocation4], %s315
      %s317 = sshll.u32 [#allocation8], 4
      %s318 = int_to_ptr.vmem [resolvable:$true] %s317
      %323 = dma.vmem_to_hbm [thread:$0]  %s318, 256, %s5, [#allocation4], 128, 128, 8
    $region37: #{tpu_custom_call.1} parent=1 // pred_fallthru
      _
    // Predicated region
    $region38: #{tpu_custom_call.1} parent=1 // pred_check
      _
    $region39: #{tpu_custom_call.1} parent=1 // pred_check_branch
      %325 = sbr.rel (0) target = $region41
    $region40: #{tpu_custom_call.1} parent=1 // pred_region
      %326 = dma.done [#allocation4], 256
    $region41: #{tpu_custom_call.1} parent=1 // pred_fallthru
      _
    %327 = vsyncpa [#allocation3], 1
    %328 = vsyncpa [#allocation6], 1
    %329 = vsyncpa [#allocation4], 1

</llo_original>
